<compile_context>
chip_gen: v7x
topology: tpu7x:2x2x1
jax: 0.10.0
libtpu: 0.0.40
codegen_flags: <defaults>
</compile_context>

<pallas_src>
import jax
import jax.numpy as jnp
from jax.experimental import pallas as pl
from jax.experimental.pallas import tpu as pltpu

LANE = 128      # lane width: last-dim alignment target
SUBLANE = 8     # sublane: second-to-last dim alignment target


def _round_up(n, m):
    return ((n + m - 1) // m) * m


def _batch_plan(batch):
    """Pad B to an 8-aligned multiple of the chosen batch tile."""
    b_pad = _round_up(max(batch, SUBLANE), SUBLANE)
    tb = min(512, b_pad)
    b_pad = _round_up(b_pad, tb)
    return b_pad, tb


def _k_plan(d):
    """Pad D to a 128-aligned multiple of the chosen reduction tile."""
    d_pad = _round_up(d, LANE)
    tk = min(1024, d_pad)
    d_pad = _round_up(d_pad, tk)
    return d_pad, tk


def mix_kernel(x_ref, w_ref, b_ref, out_ref, acc_ref):
    """One (tb, tk) x (tk, c_pad) MXU step; accumulate in f32, finalize with bias."""
    k = pl.program_id(1)

    @pl.when(k == 0)
    def _():
        acc_ref[...] = jnp.zeros_like(acc_ref)

    acc_ref[...] += jnp.dot(x_ref[...], w_ref[...],
                            preferred_element_type=jnp.float32)

    @pl.when(k == pl.num_programs(1) - 1)
    def _():
        out_ref[...] = (acc_ref[...] + b_ref[...]).astype(out_ref.dtype)


def prepare_mix_params(expert_w, expert_b):
    """Fold the expert reduction into the weights ONCE (model-load time).

    sum_e(x W_e + b_e) = x (sum_e W_e) + (sum_e b_e), exact in real arithmetic.
    Returns lane-padded (d_pad, c_pad) weights and (1, c_pad) bias plus the
    true output width for slicing.
    """
    E, D, C_out = expert_w.shape
    d_pad, _ = _k_plan(D)
    c_pad = _round_up(C_out, LANE)
    w_sum = jnp.sum(expert_w, axis=0)                         # (D, C_out)
    b_sum = jnp.sum(expert_b, axis=0)                         # (C_out,)
    w_pad = jnp.zeros((d_pad, c_pad), w_sum.dtype).at[:D, :C_out].set(w_sum)
    b_pad = jnp.zeros((1, c_pad), b_sum.dtype).at[0, :C_out].set(b_sum)
    return w_pad, b_pad, C_out


def mix_model_forward(x, w_pad, b_pad, c_out, gate_w=None, gate_b=None):
    """x: (B, C, H, W) float32. w_pad: (d_pad, c_pad), b_pad: (1, c_pad).

    gate_w / gate_b are accepted for API parity with the PyTorch module but
    intentionally unused: the gating output never reaches the return value.
    Returns (B, c_out) float32.
    """
    B = x.shape[0]
    x_flat = x.reshape(B, -1)                                 # torch .view(B, -1) order
    D = x_flat.shape[1]

    d_pad, tk = _k_plan(D)
    c_pad = w_pad.shape[1]
    assert w_pad.shape[0] == d_pad, "params prepared with a different D"
    b_full, tb = _batch_plan(B)

    # Zero-pad batch rows and reduction columns (zeros contribute nothing).
    x_pad = jnp.zeros((b_full, d_pad), x_flat.dtype).at[:B, :D].set(x_flat)

    grid = (b_full // tb, d_pad // tk)   # reduction axis LAST, "arbitrary"

    grid_spec = pltpu.PrefetchScalarGridSpec(
        num_scalar_prefetch=0,
        grid=grid,
        in_specs=[
            pl.BlockSpec((tb, tk), lambda i, k: (i, k)),      # activation tile
            pl.BlockSpec((tk, c_pad), lambda i, k: (k, 0)),   # pre-summed weights
            pl.BlockSpec((1, c_pad), lambda i, k: (0, 0)),    # pre-summed bias
        ],
        out_specs=pl.BlockSpec((tb, c_pad), lambda i, k: (i, 0)),
        scratch_shapes=[pltpu.VMEM((tb, c_pad), jnp.float32)],
    )

    itemsize = jnp.dtype(jnp.float32).itemsize
    cost = pl.CostEstimate(
        flops=2 * b_full * d_pad * c_pad,
        bytes_accessed=(x_pad.size + w_pad.size + b_pad.size
                        + b_full * c_pad) * itemsize,
        transcendentals=0,
    )

    out = pl.pallas_call(
        mix_kernel,
        out_shape=jax.ShapeDtypeStruct((b_full, c_pad), jnp.float32),
        grid_spec=grid_spec,
        compiler_params=pltpu.CompilerParams(
            dimension_semantics=("parallel", "arbitrary"),
            vmem_limit_bytes=32 * 1024 * 1024,
        ),
        cost_estimate=cost,
    )(x_pad, w_pad, b_pad)

    return out[:B, :c_out]


def mix_model_reference(x, expert_w, expert_b, gate_w, gate_b):
    """Pure-JAX transcription of the original PyTorch forward (bug preserved)."""
    B = x.shape[0]
    x_flat = x.reshape(B, -1)
    expert_out = jnp.einsum("bd,edc->bec", x_flat, expert_w) + expert_b[None]  # (B, E, C_out)
    gate = jax.nn.softmax(x_flat @ gate_w + gate_b[0], axis=-1)                # (B, E)
    _ = expert_out * gate[..., None]        # computed then discarded, as in the torch code
    return jnp.sum(expert_out, axis=1)      # (B, C_out)


if __name__ == "__main__":
    # Small shapes consistent with the module: NCHW input, E experts, C_out classes.
    B, C, H, W = 2, 4, 16, 16
    E, C_out = 3, 16
    D = C * H * W

    key = jax.random.PRNGKey(0)
    kx, kew, keb, kgw, kgb = jax.random.split(key, 5)

    x = jax.random.normal(kx, (B, C, H, W), dtype=jnp.float32)
    expert_w = 0.05 * jax.random.normal(kew, (E, D, C_out), dtype=jnp.float32)
    expert_b = 0.05 * jax.random.normal(keb, (E, C_out), dtype=jnp.float32)
    gate_w = 0.05 * jax.random.normal(kgw, (D, E), dtype=jnp.float32)
    gate_b = 0.05 * jax.random.normal(kgb, (1, E), dtype=jnp.float32)

    # Model-load-time prep (hoisted out of the per-forward path).
    w_pad, b_pad, c_out = prepare_mix_params(expert_w, expert_b)
    w_pad, b_pad = jax.block_until_ready((w_pad, b_pad))

    out = mix_model_forward(x, w_pad, b_pad, c_out, gate_w, gate_b)
    out = jax.block_until_ready(out)

    ref = mix_model_reference(x, expert_w, expert_b, gate_w, gate_b)
    assert out.shape == (B, C_out)
    assert jnp.allclose(out, ref, atol=1e-4, rtol=1e-4), "mismatch vs reference"

    print("KERNEL_OK")
</pallas_src>

<mosaic_0001>
module attributes {stable_mosaic.version = 11 : i64} {
  func.func @mix_kernel(%arg0: i32, %arg1: i32, %arg2: memref<8x1024xf32, #tpu.memory_space<vmem>>, %arg3: memref<1024x128xf32, #tpu.memory_space<vmem>>, %arg4: memref<1x128xf32, #tpu.memory_space<vmem>>, %arg5: memref<8x128xf32, #tpu.memory_space<vmem>>, %arg6: memref<8x128xf32, #tpu.memory_space<vmem>>) attributes {dimension_semantics = [#tpu.dimension_semantics<parallel>, #tpu.dimension_semantics<arbitrary>], iteration_bounds = array<i64: 1, 1>, scalar_prefetch = 0 : i64, scratch_operands = 1 : i64, tpu.core_type = #tpu.core_type<tc>, window_params = [{transform_indices = @transform_0, window_bounds = array<i64: 8, 1024>}, {transform_indices = @transform_1, window_bounds = array<i64: 1024, 128>}, {pipeline_mode = #tpu.pipeline_mode<synchronous>, transform_indices = @transform_2, window_bounds = array<i64: 1, 128>}, {transform_indices = @transform_3, window_bounds = array<i64: 8, 128>}]} {
    %c0_i32 = arith.constant 0 : i32
    %0 = arith.cmpi eq, %arg1, %c0_i32 : i32
    %1 = arith.extui %0 : i1 to i32
    %c0_i32_0 = arith.constant 0 : i32
    %2 = arith.cmpi ne, %1, %c0_i32_0 : i32
    scf.if %2 {
      %cst_10 = arith.constant 0.000000e+00 : f32
      %12 = vector.broadcast %cst_10 : f32 to vector<8x128xf32>
      %c0_11 = arith.constant 0 : index
      %c0_12 = arith.constant 0 : index
      %13 = vector.load %arg6[%c0_11, %c0_12] : memref<8x128xf32, #tpu.memory_space<vmem>>, vector<8x128xf32>
      tpu.vector_store %arg6[%c0_11, %c0_12], %12 {strides = array<i32>} : memref<8x128xf32, #tpu.memory_space<vmem>>, vector<8x128xf32>,
    } else {
    }
    %c0 = arith.constant 0 : index
    %c0_1 = arith.constant 0 : index
    %3 = vector.load %arg6[%c0, %c0_1] : memref<8x128xf32, #tpu.memory_space<vmem>>, vector<8x128xf32>
    %c0_2 = arith.constant 0 : index
    %c0_3 = arith.constant 0 : index
    %4 = vector.load %arg2[%c0_2, %c0_3] : memref<8x1024xf32, #tpu.memory_space<vmem>>, vector<8x1024xf32>
    %c0_4 = arith.constant 0 : index
    %c0_5 = arith.constant 0 : index
    %5 = vector.load %arg3[%c0_4, %c0_5] : memref<1024x128xf32, #tpu.memory_space<vmem>>, vector<1024x128xf32>
    %cst = arith.constant dense<0.000000e+00> : vector<8x128xf32>
    %6 = tpu.matmul %4, %5, %cst {dimension_numbers = #tpu.dot_dimension_numbers<[1], [0], [0], [1], [0, 0, 1, 1], [], []>} : vector<8x1024xf32>, vector<1024x128xf32>, vector<8x128xf32> -> vector<8x128xf32>
    %7 = arith.addf %3, %6 : vector<8x128xf32>
    %c0_6 = arith.constant 0 : index
    %c0_7 = arith.constant 0 : index
    %8 = vector.load %arg6[%c0_6, %c0_7] : memref<8x128xf32, #tpu.memory_space<vmem>>, vector<8x128xf32>
    tpu.vector_store %arg6[%c0_6, %c0_7], %7 {strides = array<i32>} : memref<8x128xf32, #tpu.memory_space<vmem>>, vector<8x128xf32>,
    %c0_i32_8 = arith.constant 0 : i32
    %9 = arith.cmpi eq, %arg1, %c0_i32_8 : i32
    %10 = arith.extui %9 : i1 to i32
    %c0_i32_9 = arith.constant 0 : i32
    %11 = arith.cmpi ne, %10, %c0_i32_9 : i32
    scf.if %11 {
      %c0_10 = arith.constant 0 : index
      %c0_11 = arith.constant 0 : index
      %12 = vector.load %arg6[%c0_10, %c0_11] : memref<8x128xf32, #tpu.memory_space<vmem>>, vector<8x128xf32>
      %c0_12 = arith.constant 0 : index
      %c0_13 = arith.constant 0 : index
      %13 = vector.load %arg4[%c0_12, %c0_13] : memref<1x128xf32, #tpu.memory_space<vmem>>, vector<1x128xf32>
      %14 = vector.broadcast %13 : vector<1x128xf32> to vector<8x128xf32>
      %15 = arith.addf %12, %14 : vector<8x128xf32>
      %c0_14 = arith.constant 0 : index
      %c0_15 = arith.constant 0 : index
      %16 = vector.load %arg5[%c0_14, %c0_15] : memref<8x128xf32, #tpu.memory_space<vmem>>, vector<8x128xf32>
      tpu.vector_store %arg5[%c0_14, %c0_15], %15 {strides = array<i32>} : memref<8x128xf32, #tpu.memory_space<vmem>>, vector<8x128xf32>,
    } else {
    }
    return
  }
  func.func @transform_0(%arg0: i32, %arg1: i32) -> (i32, i32) {
    %c0_i32 = arith.constant 0 : i32
    return %arg0, %arg1 : i32, i32
  }
  func.func @transform_1(%arg0: i32, %arg1: i32) -> (i32, i32) {
    %c0_i32 = arith.constant 0 : i32
    %c0_i32_0 = arith.constant 0 : i32
    return %arg1, %c0_i32 : i32, i32
  }
  func.func @transform_2(%arg0: i32, %arg1: i32) -> (i32, i32) {
    %c0_i32 = arith.constant 0 : i32
    %c0_i32_0 = arith.constant 0 : i32
    %c0_i32_1 = arith.constant 0 : i32
    return %c0_i32, %c0_i32_0 : i32, i32
  }
  func.func @transform_3(%arg0: i32, %arg1: i32) -> (i32, i32) {
    %c0_i32 = arith.constant 0 : i32
    %c0_i32_0 = arith.constant 0 : i32
    return %arg0, %c0_i32 : i32, i32
  }
}

</mosaic_0001>

<llo_original>
// kernel: tpu_custom_call.1
$region0: #{tpu_custom_call.1}
  #allocation0 [shape = 'u32[]', space=smem, size = 0x4, offset = 0x4, fixed_abs, tag = 'smem constant byte address 0x4 - core index']
  #allocation1 [shape = 'u32[144,128]{1,0:T(1,128)}', space=vmem, size = 0x12000, scoped, tag = 'internal scratch']
  #allocation2 [shape = 'f32[8,128]{1,0:T(8,128)}', space=vmem, size = 0x1000, scoped, tag = 'scratch operand']
  %s0 = inlined_call_operand.hbm [shape: f32[8,1024], index: 0, kind: input, shape index: {}]
  %s1 = inlined_call_operand.hbm [shape: f32[1024,128], index: 1, kind: input, shape index: {}]
  %s2 = inlined_call_operand.vmem [shape: f32[1,128], index: 2, kind: input, shape index: {}]
  %s3 = inlined_call_operand.hbm [shape: f32[8,128], index: 3, kind: output, shape index: {}]
  %s4 = sld [smem:[#allocation0]]
  $region38: #{tpu_custom_call.1} parent=0
    _
  %s6 = ssub.s32 1, %s4
  %s7 = scalar_select 0, %s6, %s4
  $region1: #{tpu_custom_call.1} parent=0
    #allocation3 [shape = 'u8[32768]{0}', space=vmem, size = 0x8000, scoped, tag = 'input window, operand 0, single buffered']
    #allocation4 [shape = 's32[1]{0}', space=sflag, size = 0x4, scoped, tag = 'scoped memory for tpu_custom_call.1']
    #allocation5 [shape = 's32[1]{0}', space=sflag, size = 0x4, scoped, tag = 'scoped memory for tpu_custom_call.1']
    #allocation6 [shape = 'u8[524288]{0}', space=vmem, size = 0x80000, scoped, tag = 'input window, operand 1, single buffered']
    #allocation7 [shape = 's32[1]{0}', space=sflag, size = 0x4, scoped, tag = 'scoped memory for tpu_custom_call.1']
    #allocation8 [shape = 'u8[4096]{0}', space=vmem, size = 0x1000, scoped, tag = 'output window, operand 0, single buffered']
    %8 = vsyncpa [#allocation4], 0
    %9 = vsyncpa [#allocation7], 0
    %10 = vsyncpa [#allocation5], 0
    // Predicated region
    $region2: #{tpu_custom_call.1} parent=1 // pred_check
      _
    $region3: #{tpu_custom_call.1} parent=1 // pred_check_branch
      %12 = sbr.rel (0) target = $region5
    $region4: #{tpu_custom_call.1} parent=1 // pred_region
      %s14 = ssub.s32 1024, 1024
      %15 = vsyncadd [#allocation4], %s14
      %s17 = sshll.u32 [#allocation3], 4
      %s18 = int_to_ptr.vmem [resolvable:$true] %s17
      %20 = dma.hbm_to_vmem [thread:$0]  %s0, 1024, %s18, [#allocation4]
    $region5: #{tpu_custom_call.1} parent=1 // pred_fallthru
      _
    // Predicated region
    $region6: #{tpu_custom_call.1} parent=1 // pred_check
      _
    $region7: #{tpu_custom_call.1} parent=1 // pred_check_branch
      %22 = sbr.rel (0) target = $region9
    $region8: #{tpu_custom_call.1} parent=1 // pred_region
      %s24 = ssub.s32 16384, 16384
      %25 = vsyncadd [#allocation7], %s24
      %s26 = sshll.u32 [#allocation6], 4
      %s27 = int_to_ptr.vmem [resolvable:$true] %s26
      %32 = dma.hbm_to_vmem [thread:$0]  %s1, 16384, %s27, [#allocation7], 128, 128, 8
    $region9: #{tpu_custom_call.1} parent=1 // pred_fallthru
      _
    // Predicated region
    $region10: #{tpu_custom_call.1} parent=1 // pred_check
      _
    $region11: #{tpu_custom_call.1} parent=1 // pred_check_branch
      %34 = sbr.rel (0) target = $region13
    $region12: #{tpu_custom_call.1} parent=1 // pred_region
      _
    $region13: #{tpu_custom_call.1} parent=1 // pred_fallthru
      _
    // Predicated region
    $region14: #{tpu_custom_call.1} parent=1 // pred_check
      _
    $region15: #{tpu_custom_call.1} parent=1 // pred_check_branch
      %36 = sbr.rel (0) target = $region17
    $region16: #{tpu_custom_call.1} parent=1 // pred_region
      %37 = dma.done [#allocation4], 1024
    $region17: #{tpu_custom_call.1} parent=1 // pred_fallthru
      _
    // Predicated region
    $region18: #{tpu_custom_call.1} parent=1 // pred_check
      _
    $region19: #{tpu_custom_call.1} parent=1 // pred_check_branch
      %39 = sbr.rel (0) target = $region21
    $region20: #{tpu_custom_call.1} parent=1 // pred_region
      %40 = dma.done [#allocation7], 16384
    $region21: #{tpu_custom_call.1} parent=1 // pred_fallthru
      _
    %p41 = scmp.eq.s32.totalorder 0, 0
    // Predicated region
    $region22: #{tpu_custom_call.1} parent=1 // pred_check
      %p42 = pneg %p41
    $region23: #{tpu_custom_call.1} parent=1 // pred_check_branch
      %44 = sbr.rel (%p42) target = $region25
    $region24: #{tpu_custom_call.1} parent=1 // pred_region
      %45 = vst [vmem:[#allocation2] sm:$0xff] 0.0
    $region25: #{tpu_custom_call.1} parent=1 // pred_fallthru
      _
    %v46 = vld [vmem:[#allocation2] sm:$0xff]
    %v47 = vld [vmem:[#allocation3] sm:$0xff]
    %v48 = vld [vmem:[#allocation3 + $0x8] sm:$0xff]
    %v49 = vld [vmem:[#allocation3 + $0x10] sm:$0xff]
    %v50 = vld [vmem:[#allocation3 + $0x18] sm:$0xff]
    %v51 = vld [vmem:[#allocation3 + $0x20] sm:$0xff]
    %v52 = vld [vmem:[#allocation3 + $0x28] sm:$0xff]
    %v53 = vld [vmem:[#allocation3 + $0x30] sm:$0xff]
    %v54 = vld [vmem:[#allocation3 + $0x38] sm:$0xff]
    %v55 = vld [vmem:[#allocation6] sm:$0xff]
    %v56 = vld [vmem:[#allocation6 + $0x8] sm:$0xff]
    %v57 = vld [vmem:[#allocation6 + $0x10] sm:$0xff]
    %v58 = vld [vmem:[#allocation6 + $0x18] sm:$0xff]
    %v59 = vld [vmem:[#allocation6 + $0x20] sm:$0xff]
    %v60 = vld [vmem:[#allocation6 + $0x28] sm:$0xff]
    %v61 = vld [vmem:[#allocation6 + $0x30] sm:$0xff]
    %v62 = vld [vmem:[#allocation6 + $0x38] sm:$0xff]
    %v63 = vld [vmem:[#allocation6 + $0x40] sm:$0xff]
    %v64 = vld [vmem:[#allocation6 + $0x48] sm:$0xff]
    %v65 = vld [vmem:[#allocation6 + $0x50] sm:$0xff]
    %v66 = vld [vmem:[#allocation6 + $0x58] sm:$0xff]
    %v67 = vld [vmem:[#allocation6 + $0x60] sm:$0xff]
    %v68 = vld [vmem:[#allocation6 + $0x68] sm:$0xff]
    %v69 = vld [vmem:[#allocation6 + $0x70] sm:$0xff]
    %v70 = vld [vmem:[#allocation6 + $0x78] sm:$0xff]
    %v71 = vld [vmem:[#allocation6 + $0x80] sm:$0xff]
    %v72 = vld [vmem:[#allocation6 + $0x88] sm:$0xff]
    %v73 = vld [vmem:[#allocation6 + $0x90] sm:$0xff]
    %v74 = vld [vmem:[#allocation6 + $0x98] sm:$0xff]
    %v75 = vld [vmem:[#allocation6 + $0xa0] sm:$0xff]
    %v76 = vld [vmem:[#allocation6 + $0xa8] sm:$0xff]
    %v77 = vld [vmem:[#allocation6 + $0xb0] sm:$0xff]
    %v78 = vld [vmem:[#allocation6 + $0xb8] sm:$0xff]
    %v79 = vld [vmem:[#allocation6 + $0xc0] sm:$0xff]
    %v80 = vld [vmem:[#allocation6 + $0xc8] sm:$0xff]
    %v81 = vld [vmem:[#allocation6 + $0xd0] sm:$0xff]
    %v82 = vld [vmem:[#allocation6 + $0xd8] sm:$0xff]
    %v83 = vld [vmem:[#allocation6 + $0xe0] sm:$0xff]
    %v84 = vld [vmem:[#allocation6 + $0xe8] sm:$0xff]
    %v85 = vld [vmem:[#allocation6 + $0xf0] sm:$0xff]
    %v86 = vld [vmem:[#allocation6 + $0xf8] sm:$0xff]
    %v87 = vld [vmem:[#allocation6 + $0x100] sm:$0xff]
    %v88 = vld [vmem:[#allocation6 + $0x108] sm:$0xff]
    %v89 = vld [vmem:[#allocation6 + $0x110] sm:$0xff]
    %v90 = vld [vmem:[#allocation6 + $0x118] sm:$0xff]
    %v91 = vld [vmem:[#allocation6 + $0x120] sm:$0xff]
    %v92 = vld [vmem:[#allocation6 + $0x128] sm:$0xff]
    %v93 = vld [vmem:[#allocation6 + $0x130] sm:$0xff]
    %v94 = vld [vmem:[#allocation6 + $0x138] sm:$0xff]
    %v95 = vld [vmem:[#allocation6 + $0x140] sm:$0xff]
    %v96 = vld [vmem:[#allocation6 + $0x148] sm:$0xff]
    %v97 = vld [vmem:[#allocation6 + $0x150] sm:$0xff]
    %v98 = vld [vmem:[#allocation6 + $0x158] sm:$0xff]
    %v99 = vld [vmem:[#allocation6 + $0x160] sm:$0xff]
    %v100 = vld [vmem:[#allocation6 + $0x168] sm:$0xff]
    %v101 = vld [vmem:[#allocation6 + $0x170] sm:$0xff]
    %v102 = vld [vmem:[#allocation6 + $0x178] sm:$0xff]
    %v103 = vld [vmem:[#allocation6 + $0x180] sm:$0xff]
    %v104 = vld [vmem:[#allocation6 + $0x188] sm:$0xff]
    %v105 = vld [vmem:[#allocation6 + $0x190] sm:$0xff]
    %v106 = vld [vmem:[#allocation6 + $0x198] sm:$0xff]
    %v107 = vld [vmem:[#allocation6 + $0x1a0] sm:$0xff]
    %v108 = vld [vmem:[#allocation6 + $0x1a8] sm:$0xff]
    %v109 = vld [vmem:[#allocation6 + $0x1b0] sm:$0xff]
    %v110 = vld [vmem:[#allocation6 + $0x1b8] sm:$0xff]
    %v111 = vld [vmem:[#allocation6 + $0x1c0] sm:$0xff]
    %v112 = vld [vmem:[#allocation6 + $0x1c8] sm:$0xff]
    %v113 = vld [vmem:[#allocation6 + $0x1d0] sm:$0xff]
    %v114 = vld [vmem:[#allocation6 + $0x1d8] sm:$0xff]
    %v115 = vld [vmem:[#allocation6 + $0x1e0] sm:$0xff]
    %v116 = vld [vmem:[#allocation6 + $0x1e8] sm:$0xff]
    %v117 = vld [vmem:[#allocation6 + $0x1f0] sm:$0xff]
    %v118 = vld [vmem:[#allocation6 + $0x1f8] sm:$0xff]
    %v119 = vld [vmem:[#allocation6 + $0x200] sm:$0xff]
    %v120 = vld [vmem:[#allocation6 + $0x208] sm:$0xff]
    %v121 = vld [vmem:[#allocation6 + $0x210] sm:$0xff]
    %v122 = vld [vmem:[#allocation6 + $0x218] sm:$0xff]
    %v123 = vld [vmem:[#allocation6 + $0x220] sm:$0xff]
    %v124 = vld [vmem:[#allocation6 + $0x228] sm:$0xff]
    %v125 = vld [vmem:[#allocation6 + $0x230] sm:$0xff]
    %v126 = vld [vmem:[#allocation6 + $0x238] sm:$0xff]
    %v127 = vld [vmem:[#allocation6 + $0x240] sm:$0xff]
    %v128 = vld [vmem:[#allocation6 + $0x248] sm:$0xff]
    %v129 = vld [vmem:[#allocation6 + $0x250] sm:$0xff]
    %v130 = vld [vmem:[#allocation6 + $0x258] sm:$0xff]
    %v131 = vld [vmem:[#allocation6 + $0x260] sm:$0xff]
    %v132 = vld [vmem:[#allocation6 + $0x268] sm:$0xff]
    %v133 = vld [vmem:[#allocation6 + $0x270] sm:$0xff]
    %v134 = vld [vmem:[#allocation6 + $0x278] sm:$0xff]
    %v135 = vld [vmem:[#allocation6 + $0x280] sm:$0xff]
    %v136 = vld [vmem:[#allocation6 + $0x288] sm:$0xff]
    %v137 = vld [vmem:[#allocation6 + $0x290] sm:$0xff]
    %v138 = vld [vmem:[#allocation6 + $0x298] sm:$0xff]
    %v139 = vld [vmem:[#allocation6 + $0x2a0] sm:$0xff]
    %v140 = vld [vmem:[#allocation6 + $0x2a8] sm:$0xff]
    %v141 = vld [vmem:[#allocation6 + $0x2b0] sm:$0xff]
    %v142 = vld [vmem:[#allocation6 + $0x2b8] sm:$0xff]
    %v143 = vld [vmem:[#allocation6 + $0x2c0] sm:$0xff]
    %v144 = vld [vmem:[#allocation6 + $0x2c8] sm:$0xff]
    %v145 = vld [vmem:[#allocation6 + $0x2d0] sm:$0xff]
    %v146 = vld [vmem:[#allocation6 + $0x2d8] sm:$0xff]
    %v147 = vld [vmem:[#allocation6 + $0x2e0] sm:$0xff]
    %v148 = vld [vmem:[#allocation6 + $0x2e8] sm:$0xff]
    %v149 = vld [vmem:[#allocation6 + $0x2f0] sm:$0xff]
    %v150 = vld [vmem:[#allocation6 + $0x2f8] sm:$0xff]
    %v151 = vld [vmem:[#allocation6 + $0x300] sm:$0xff]
    %v152 = vld [vmem:[#allocation6 + $0x308] sm:$0xff]
    %v153 = vld [vmem:[#allocation6 + $0x310] sm:$0xff]
    %v154 = vld [vmem:[#allocation6 + $0x318] sm:$0xff]
    %v155 = vld [vmem:[#allocation6 + $0x320] sm:$0xff]
    %v156 = vld [vmem:[#allocation6 + $0x328] sm:$0xff]
    %v157 = vld [vmem:[#allocation6 + $0x330] sm:$0xff]
    %v158 = vld [vmem:[#allocation6 + $0x338] sm:$0xff]
    %v159 = vld [vmem:[#allocation6 + $0x340] sm:$0xff]
    %v160 = vld [vmem:[#allocation6 + $0x348] sm:$0xff]
    %v161 = vld [vmem:[#allocation6 + $0x350] sm:$0xff]
    %v162 = vld [vmem:[#allocation6 + $0x358] sm:$0xff]
    %v163 = vld [vmem:[#allocation6 + $0x360] sm:$0xff]
    %v164 = vld [vmem:[#allocation6 + $0x368] sm:$0xff]
    %v165 = vld [vmem:[#allocation6 + $0x370] sm:$0xff]
    %v166 = vld [vmem:[#allocation6 + $0x378] sm:$0xff]
    %v167 = vld [vmem:[#allocation6 + $0x380] sm:$0xff]
    %v168 = vld [vmem:[#allocation6 + $0x388] sm:$0xff]
    %v169 = vld [vmem:[#allocation6 + $0x390] sm:$0xff]
    %v170 = vld [vmem:[#allocation6 + $0x398] sm:$0xff]
    %v171 = vld [vmem:[#allocation6 + $0x3a0] sm:$0xff]
    %v172 = vld [vmem:[#allocation6 + $0x3a8] sm:$0xff]
    %v173 = vld [vmem:[#allocation6 + $0x3b0] sm:$0xff]
    %v174 = vld [vmem:[#allocation6 + $0x3b8] sm:$0xff]
    %v175 = vld [vmem:[#allocation6 + $0x3c0] sm:$0xff]
    %v176 = vld [vmem:[#allocation6 + $0x3c8] sm:$0xff]
    %v177 = vld [vmem:[#allocation6 + $0x3d0] sm:$0xff]
    %v178 = vld [vmem:[#allocation6 + $0x3d8] sm:$0xff]
    %v179 = vld [vmem:[#allocation6 + $0x3e0] sm:$0xff]
    %v180 = vld [vmem:[#allocation6 + $0x3e8] sm:$0xff]
    %v181 = vld [vmem:[#allocation6 + $0x3f0] sm:$0xff]
    %v182 = vld [vmem:[#allocation6 + $0x3f8] sm:$0xff]
    %183 = vmatprep.subr.mxu0 0.0
    %184 = vmatpush1.msra.mxu0 %v55
    %185 = vmatprep.subr.mxu0 0.0
    %186 = vmatpush1.msra.mxu0 %v56
    %187 = vmatprep.subr.mxu0 0.0
    %188 = vmatpush1.msra.mxu0 %v57
    %189 = vmatprep.subr.mxu0 0.0
    %190 = vmatpush1.msra.mxu0 %v58
    %191 = vmatprep.subr.mxu0 0.0
    %192 = vmatpush1.msra.mxu0 %v59
    %193 = vmatprep.subr.mxu0 0.0
    %194 = vmatpush1.msra.mxu0 %v60
    %195 = vmatprep.subr.mxu0 0.0
    %196 = vmatpush1.msra.mxu0 %v61
    %197 = vmatprep.subr.mxu0 0.0
    %198 = vmatpush1.msra.mxu0 %v62
    %199 = vmatprep.subr.mxu0 0.0
    %200 = vmatpush1.msra.mxu0 %v63
    %201 = vmatprep.subr.mxu0 0.0
    %202 = vmatpush1.msra.mxu0 %v64
    %203 = vmatprep.subr.mxu0 0.0
    %204 = vmatpush1.msra.mxu0 %v65
    %205 = vmatprep.subr.mxu0 0.0
    %206 = vmatpush1.msra.mxu0 %v66
    %207 = vmatprep.subr.mxu0 0.0
    %208 = vmatpush1.msra.mxu0 %v67
    %209 = vmatprep.subr.mxu0 0.0
    %210 = vmatpush1.msra.mxu0 %v68
    %211 = vmatprep.subr.mxu0 0.0
    %212 = vmatpush1.msra.mxu0 %v69
    %213 = vmatprep.subr.mxu0 0.0
    %214 = vmatpush1.msra.mxu0 %v70
    %215 = vmatprep.subr.mxu0 0.0
    %216 = vmatpush1.msra.mxu0 %v71
    %217 = vmatprep.subr.mxu0 0.0
    %218 = vmatpush1.msra.mxu0 %v72
    %219 = vmatprep.subr.mxu0 0.0
    %220 = vmatpush1.msra.mxu0 %v73
    %221 = vmatprep.subr.mxu0 0.0
    %222 = vmatpush1.msra.mxu0 %v74
    %223 = vmatprep.subr.mxu0 0.0
    %224 = vmatpush1.msra.mxu0 %v75
    %225 = vmatprep.subr.mxu0 0.0
    %226 = vmatpush1.msra.mxu0 %v76
    %227 = vmatprep.subr.mxu0 0.0
    %228 = vmatpush1.msra.mxu0 %v77
    %229 = vmatprep.subr.mxu0 0.0
    %230 = vmatpush1.msra.mxu0 %v78
    %231 = vmatprep.subr.mxu0 0.0
    %232 = vmatpush1.msra.mxu0 %v79
    %233 = vmatprep.subr.mxu0 0.0
    %234 = vmatpush1.msra.mxu0 %v80
    %235 = vmatprep.subr.mxu0 0.0
    %236 = vmatpush1.msra.mxu0 %v81
    %237 = vmatprep.subr.mxu0 0.0
    %238 = vmatpush1.msra.mxu0 %v82
    %239 = vmatprep.subr.mxu0 0.0
    %240 = vmatpush1.msra.mxu0 %v83
    %241 = vmatprep.subr.mxu0 0.0
    %242 = vmatpush1.msra.mxu0 %v84
    %243 = vmatprep.subr.mxu0 0.0
    %244 = vmatpush1.msra.mxu0 %v85
    %245 = vmatprep.subr.mxu0 0.0
    %246 = vmatpush1.msra.mxu0 %v86
    %247 = vmatprep.mubr.f32.mxu0 %v48
    %248 = vmatmul.mubr.f32.gmra.mrb[0].mxu0 %v47
    %v249 = vpop.f32.mrb[0].mxu0
    %v250 = vadd.f32 0.0, %v249
    %v251 = vpop.f32.mrb[0].mxu0
    %252 = vdwg.mxu0
    %253 = vmatprep.subr.mxu0 0.0
    %254 = vmatpush1.msra.mxu0 %v87
    %255 = vmatprep.subr.mxu0 0.0
    %256 = vmatpush1.msra.mxu0 %v88
    %257 = vmatprep.subr.mxu0 0.0
    %258 = vmatpush1.msra.mxu0 %v89
    %259 = vmatprep.subr.mxu0 0.0
    %260 = vmatpush1.msra.mxu0 %v90
    %261 = vmatprep.subr.mxu0 0.0
    %262 = vmatpush1.msra.mxu0 %v91
    %263 = vmatprep.subr.mxu0 0.0
    %264 = vmatpush1.msra.mxu0 %v92
    %265 = vmatprep.subr.mxu0 0.0
    %266 = vmatpush1.msra.mxu0 %v93
    %267 = vmatprep.subr.mxu0 0.0
    %268 = vmatpush1.msra.mxu0 %v94
    %269 = vmatprep.subr.mxu0 0.0
    %270 = vmatpush1.msra.mxu0 %v95
    %271 = vmatprep.subr.mxu0 0.0
    %272 = vmatpush1.msra.mxu0 %v96
    %273 = vmatprep.subr.mxu0 0.0
    %274 = vmatpush1.msra.mxu0 %v97
    %275 = vmatprep.subr.mxu0 0.0
    %276 = vmatpush1.msra.mxu0 %v98
    %277 = vmatprep.subr.mxu0 0.0
    %278 = vmatpush1.msra.mxu0 %v99
    %279 = vmatprep.subr.mxu0 0.0
    %280 = vmatpush1.msra.mxu0 %v100
    %281 = vmatprep.subr.mxu0 0.0
    %282 = vmatpush1.msra.mxu0 %v101
    %283 = vmatprep.subr.mxu0 0.0
    %284 = vmatpush1.msra.mxu0 %v102
    %285 = vmatprep.subr.mxu0 0.0
    %286 = vmatpush1.msra.mxu0 %v103
    %287 = vmatprep.subr.mxu0 0.0
    %288 = vmatpush1.msra.mxu0 %v104
    %289 = vmatprep.subr.mxu0 0.0
    %290 = vmatpush1.msra.mxu0 %v105
    %291 = vmatprep.subr.mxu0 0.0
    %292 = vmatpush1.msra.mxu0 %v106
    %293 = vmatprep.subr.mxu0 0.0
    %294 = vmatpush1.msra.mxu0 %v107
    %295 = vmatprep.subr.mxu0 0.0
    %296 = vmatpush1.msra.mxu0 %v108
    %297 = vmatprep.subr.mxu0 0.0
    %298 = vmatpush1.msra.mxu0 %v109
    %299 = vmatprep.subr.mxu0 0.0
    %300 = vmatpush1.msra.mxu0 %v110
    %301 = vmatprep.subr.mxu0 0.0
    %302 = vmatpush1.msra.mxu0 %v111
    %303 = vmatprep.subr.mxu0 0.0
    %304 = vmatpush1.msra.mxu0 %v112
    %305 = vmatprep.subr.mxu0 0.0
    %306 = vmatpush1.msra.mxu0 %v113
    %307 = vmatprep.subr.mxu0 0.0
    %308 = vmatpush1.msra.mxu0 %v114
    %309 = vmatprep.subr.mxu0 0.0
    %310 = vmatpush1.msra.mxu0 %v115
    %311 = vmatprep.subr.mxu0 0.0
    %312 = vmatpush1.msra.mxu0 %v116
    %313 = vmatprep.subr.mxu0 0.0
    %314 = vmatpush1.msra.mxu0 %v117
    %315 = vmatprep.subr.mxu0 0.0
    %316 = vmatpush1.msra.mxu0 %v118
    %317 = vmatprep.mubr.f32.mxu0 %v50
    %318 = vmatmul.mubr.f32.gmra.mrb[0].mxu0 %v49
    %v319 = vpop.f32.mrb[0].mxu0
    %v320 = vadd.f32 %v250, %v319
    %v321 = vpop.f32.mrb[0].mxu0
    %322 = vdwg.mxu0
    %323 = vmatprep.subr.mxu0 0.0
    %324 = vmatpush1.msra.mxu0 %v119
    %325 = vmatprep.subr.mxu0 0.0
    %326 = vmatpush1.msra.mxu0 %v120
    %327 = vmatprep.subr.mxu0 0.0
    %328 = vmatpush1.msra.mxu0 %v121
    %329 = vmatprep.subr.mxu0 0.0
    %330 = vmatpush1.msra.mxu0 %v122
    %331 = vmatprep.subr.mxu0 0.0
    %332 = vmatpush1.msra.mxu0 %v123
    %333 = vmatprep.subr.mxu0 0.0
    %334 = vmatpush1.msra.mxu0 %v124
    %335 = vmatprep.subr.mxu0 0.0
    %336 = vmatpush1.msra.mxu0 %v125
    %337 = vmatprep.subr.mxu0 0.0
    %338 = vmatpush1.msra.mxu0 %v126
    %339 = vmatprep.subr.mxu0 0.0
    %340 = vmatpush1.msra.mxu0 %v127
    %341 = vmatprep.subr.mxu0 0.0
    %342 = vmatpush1.msra.mxu0 %v128
    %343 = vmatprep.subr.mxu0 0.0
    %344 = vmatpush1.msra.mxu0 %v129
    %345 = vmatprep.subr.mxu0 0.0
    %346 = vmatpush1.msra.mxu0 %v130
    %347 = vmatprep.subr.mxu0 0.0
    %348 = vmatpush1.msra.mxu0 %v131
    %349 = vmatprep.subr.mxu0 0.0
    %350 = vmatpush1.msra.mxu0 %v132
    %351 = vmatprep.subr.mxu0 0.0
    %352 = vmatpush1.msra.mxu0 %v133
    %353 = vmatprep.subr.mxu0 0.0
    %354 = vmatpush1.msra.mxu0 %v134
    %355 = vmatprep.subr.mxu0 0.0
    %356 = vmatpush1.msra.mxu0 %v135
    %357 = vmatprep.subr.mxu0 0.0
    %358 = vmatpush1.msra.mxu0 %v136
    %359 = vmatprep.subr.mxu0 0.0
    %360 = vmatpush1.msra.mxu0 %v137
    %361 = vmatprep.subr.mxu0 0.0
    %362 = vmatpush1.msra.mxu0 %v138
    %363 = vmatprep.subr.mxu0 0.0
    %364 = vmatpush1.msra.mxu0 %v139
    %365 = vmatprep.subr.mxu0 0.0
    %366 = vmatpush1.msra.mxu0 %v140
    %367 = vmatprep.subr.mxu0 0.0
    %368 = vmatpush1.msra.mxu0 %v141
    %369 = vmatprep.subr.mxu0 0.0
    %370 = vmatpush1.msra.mxu0 %v142
    %371 = vmatprep.subr.mxu0 0.0
    %372 = vmatpush1.msra.mxu0 %v143
    %373 = vmatprep.subr.mxu0 0.0
    %374 = vmatpush1.msra.mxu0 %v144
    %375 = vmatprep.subr.mxu0 0.0
    %376 = vmatpush1.msra.mxu0 %v145
    %377 = vmatprep.subr.mxu0 0.0
    %378 = vmatpush1.msra.mxu0 %v146
    %379 = vmatprep.subr.mxu0 0.0
    %380 = vmatpush1.msra.mxu0 %v147
    %381 = vmatprep.subr.mxu0 0.0
    %382 = vmatpush1.msra.mxu0 %v148
    %383 = vmatprep.subr.mxu0 0.0
    %384 = vmatpush1.msra.mxu0 %v149
    %385 = vmatprep.subr.mxu0 0.0
    %386 = vmatpush1.msra.mxu0 %v150
    %387 = vmatprep.mubr.f32.mxu0 %v52
    %388 = vmatmul.mubr.f32.gmra.mrb[0].mxu0 %v51
    %v389 = vpop.f32.mrb[0].mxu0
    %v390 = vadd.f32 %v320, %v389
    %v391 = vpop.f32.mrb[0].mxu0
    %392 = vdwg.mxu0
    %393 = vmatprep.subr.mxu0 0.0
    %394 = vmatpush1.msra.mxu0 %v151
    %395 = vmatprep.subr.mxu0 0.0
    %396 = vmatpush1.msra.mxu0 %v152
    %397 = vmatprep.subr.mxu0 0.0
    %398 = vmatpush1.msra.mxu0 %v153
    %399 = vmatprep.subr.mxu0 0.0
    %400 = vmatpush1.msra.mxu0 %v154
    %401 = vmatprep.subr.mxu0 0.0
    %402 = vmatpush1.msra.mxu0 %v155
    %403 = vmatprep.subr.mxu0 0.0
    %404 = vmatpush1.msra.mxu0 %v156
    %405 = vmatprep.subr.mxu0 0.0
    %406 = vmatpush1.msra.mxu0 %v157
    %407 = vmatprep.subr.mxu0 0.0
    %408 = vmatpush1.msra.mxu0 %v158
    %409 = vmatprep.subr.mxu0 0.0
    %410 = vmatpush1.msra.mxu0 %v159
    %411 = vmatprep.subr.mxu0 0.0
    %412 = vmatpush1.msra.mxu0 %v160
    %413 = vmatprep.subr.mxu0 0.0
    %414 = vmatpush1.msra.mxu0 %v161
    %415 = vmatprep.subr.mxu0 0.0
    %416 = vmatpush1.msra.mxu0 %v162
    %417 = vmatprep.subr.mxu0 0.0
    %418 = vmatpush1.msra.mxu0 %v163
    %419 = vmatprep.subr.mxu0 0.0
    %420 = vmatpush1.msra.mxu0 %v164
    %421 = vmatprep.subr.mxu0 0.0
    %422 = vmatpush1.msra.mxu0 %v165
    %423 = vmatprep.subr.mxu0 0.0
    %424 = vmatpush1.msra.mxu0 %v166
    %425 = vmatprep.subr.mxu0 0.0
    %426 = vmatpush1.msra.mxu0 %v167
    %427 = vmatprep.subr.mxu0 0.0
    %428 = vmatpush1.msra.mxu0 %v168
    %429 = vmatprep.subr.mxu0 0.0
    %430 = vmatpush1.msra.mxu0 %v169
    %431 = vmatprep.subr.mxu0 0.0
    %432 = vmatpush1.msra.mxu0 %v170
    %433 = vmatprep.subr.mxu0 0.0
    %434 = vmatpush1.msra.mxu0 %v171
    %435 = vmatprep.subr.mxu0 0.0
    %436 = vmatpush1.msra.mxu0 %v172
    %437 = vmatprep.subr.mxu0 0.0
    %438 = vmatpush1.msra.mxu0 %v173
    %439 = vmatprep.subr.mxu0 0.0
    %440 = vmatpush1.msra.mxu0 %v174
    %441 = vmatprep.subr.mxu0 0.0
    %442 = vmatpush1.msra.mxu0 %v175
    %443 = vmatprep.subr.mxu0 0.0
    %444 = vmatpush1.msra.mxu0 %v176
    %445 = vmatprep.subr.mxu0 0.0
    %446 = vmatpush1.msra.mxu0 %v177
    %447 = vmatprep.subr.mxu0 0.0
    %448 = vmatpush1.msra.mxu0 %v178
    %449 = vmatprep.subr.mxu0 0.0
    %450 = vmatpush1.msra.mxu0 %v179
    %451 = vmatprep.subr.mxu0 0.0
    %452 = vmatpush1.msra.mxu0 %v180
    %453 = vmatprep.subr.mxu0 0.0
    %454 = vmatpush1.msra.mxu0 %v181
    %455 = vmatprep.subr.mxu0 0.0
    %456 = vmatpush1.msra.mxu0 %v182
    %457 = vmatprep.mubr.f32.mxu0 %v54
    %458 = vmatmul.mubr.f32.gmra.mrb[0].mxu0 %v53
    %v459 = vpop.f32.mrb[0].mxu0
    %v460 = vadd.f32 %v390, %v459
    %v461 = vpop.f32.mrb[0].mxu0
    %462 = vdwg.mxu0
    %v463 = vadd.f32 %v46, %v460
    %464 = vst [vmem:[#allocation2] sm:$0xff] %v463
    // Predicated region
    $region26: #{tpu_custom_call.1} parent=1 // pred_check
      %p465 = pneg %p41
    $region27: #{tpu_custom_call.1} parent=1 // pred_check_branch
      %467 = sbr.rel (%p465) target = $region29
    $region28: #{tpu_custom_call.1} parent=1 // pred_region
      %v468 = vld [vmem:[#allocation2] sm:$0xff]
      %v469 = vld [vmem:[%s2] sm:$0x1]
      %v471 = vlaneseq
      %v472 = vshrl.u32 %v471, 7
      %v473 = vsub.s32 0, %v472
      %v474 = vrot.slane %v469, %v473
      %v476 = vadd.f32 %v468, %v474
      %477 = vst [vmem:[#allocation8] sm:$0xff] %v476
    $region29: #{tpu_custom_call.1} parent=1 // pred_fallthru
      _
    // Predicated region
    $region30: #{tpu_custom_call.1} parent=1 // pred_check
      _
    $region31: #{tpu_custom_call.1} parent=1 // pred_check_branch
      %479 = sbr.rel (0) target = $region33
    $region32: #{tpu_custom_call.1} parent=1 // pred_region
      %s481 = ssub.s32 128, 128
      %482 = vsyncadd [#allocation5], %s481
      %s484 = sshll.u32 [#allocation8], 4
      %s485 = int_to_ptr.vmem [resolvable:$true] %s484
      %487 = dma.vmem_to_hbm [thread:$0]  %s485, 128, %s3, [#allocation5]
    $region33: #{tpu_custom_call.1} parent=1 // pred_fallthru
      _
    // Predicated region
    $region34: #{tpu_custom_call.1} parent=1 // pred_check
      _
    $region35: #{tpu_custom_call.1} parent=1 // pred_check_branch
      %489 = sbr.rel (0) target = $region37
    $region36: #{tpu_custom_call.1} parent=1 // pred_region
      %490 = dma.done [#allocation5], 128
    $region37: #{tpu_custom_call.1} parent=1 // pred_fallthru
      _
    %491 = vsyncpa [#allocation4], 1
    %492 = vsyncpa [#allocation7], 1
    %493 = vsyncpa [#allocation5], 1

</llo_original>
